<compile_context>
chip_gen: v7x
topology: tpu7x:2x2x1
jax: 0.10.0
libtpu: 0.0.40
codegen_flags: <defaults>
</compile_context>

<pallas_src>
import functools

import jax
import jax.numpy as jnp
from jax import lax
from jax.experimental import pallas as pl
from jax.experimental.pallas import tpu as pltpu


def _simclr_rowsum_kernel(zs_row_ref, zsT_col_ref, acc_ref, *,
                          inv_temp: float, acc_w: int, exp_dtype):
    """One (row-tile, col-tile) step of the streaming SimCLR row sums.

    zs_row_ref : (TM, D)   rows i of  zn * sqrt(1/T)          (resident over k)
    zsT_col_ref: (D, TN)   columns j of the same, pre-transposed (streamed)
    acc_ref    : (TM, ACC) output block = running sum_j exp(sim_ij/T - 1/T),
                           lane-dense (ACC = 128 normally) and resident across
                           the whole column sweep (output-as-accumulator).
    """
    k = pl.program_id(1)

    @pl.when(k == 0)
    def _():
        acc_ref[...] = jnp.zeros_like(acc_ref)

    # (TM, TN) tile of sim / T straight off the MXU (1/sqrt(T) is folded into
    # both operands), f32 accumulation.
    s = lax.dot_general(
        zs_row_ref[...], zsT_col_ref[...],
        (((1,), (0,)), ((), ())),
        preferred_element_type=jnp.float32,
    )

    # Online sum of exp with the analytic (upper-bound) max 1/T (cos <= 1):
    # no diagonal mask, no iota, no running-max bookkeeping.  exp optionally
    # runs in bf16 (v6e/v7x EUP) when D is small and exp is the binding unit.
    e = jnp.exp((s - inv_temp).astype(exp_dtype)).astype(jnp.float32)

    # Lane-dense partial reduction: fold TN -> ACC lanes with lane-aligned
    # VPU adds only; the final ACC -> 1 cross-lane reduce is deferred to the
    # wrapper so the XLU/extended slot stays free for the MXU pushes.
    tn = e.shape[-1]
    part = e[:, 0:acc_w]
    for c in range(1, tn // acc_w):
        part = part + e[:, c * acc_w:(c + 1) * acc_w]
    acc_ref[...] += part


def _pick_tile(total: int, want: int, align: int) -> int:
    """Largest multiple of `align`, <= want, that divides `total` (else total)."""
    t = min(want, total)
    t = (t // align) * align
    while t > 0 and total % t != 0:
        t -= align
    return t if t > 0 else total


def _shrink_tile(total: int, cur: int, align: int) -> int:
    """Next smaller valid tile (multiple of `align` dividing `total`), or cur."""
    if cur <= align:
        return cur
    cand = _pick_tile(total, max(align, cur // 2), align)
    if 0 < cand < cur:
        return cand
    cand = _pick_tile(total, cur - align, align)
    return cand if 0 < cand < cur else cur


def _vmem_capacity_bytes() -> int:
    try:
        return int(pltpu.get_tpu_info().vmem_capacity_bytes)
    except Exception:
        return 64 * 1024 * 1024     # conservative fallback (v7x per-TC VMEM)


def _device_kind() -> str:
    try:
        return jax.devices()[0].device_kind.lower()
    except Exception:
        return ""


def simclr_loss(z_i: jax.Array, z_j: jax.Array, temperature: float, *,
                block_m: int = 1024, block_n: int = 2048,
                matmul_dtype=jnp.bfloat16, exp_in_bf16=None) -> jax.Array:
    assert z_i.shape == z_j.shape and z_i.ndim == 2
    b, d = z_i.shape
    n = 2 * b
    assert b % 8 == 0, "batch size must be a multiple of 8 for TPU tiling"

    inv_temp = float(1.0 / temperature)

    # ---- O(N*D) preprocessing in plain JAX (fused by XLA; negligible vs the
    # O(N^2*D) kernel work).  PyTorch CosineSimilarity clamps ||a||*||b||;
    # clamping each row norm only differs for near-zero embeddings.
    z = jnp.concatenate([z_i, z_j], axis=0).astype(jnp.float32)        # (N, D)
    norm = jnp.sqrt(jnp.sum(z * z, axis=-1, keepdims=True))
    zn = z / jnp.maximum(norm, 1e-8)                                   # (N, D)
    # Fold 1/sqrt(T) into the operands so the MXU emits sim / T directly.
    zs = (zn * (inv_temp ** 0.5)).astype(matmul_dtype)                 # (N, D)
    zsT = zs.T                                                         # (D, N)
    # positive(i) = cos(z_i, z_{(i+B) mod N}) / T  -- O(N*D) wrapper dot (f32).
    pos = jnp.sum(zn * jnp.roll(zn, -b, axis=0), axis=-1) * inv_temp   # (N,)

    itemsize = jnp.dtype(matmul_dtype).itemsize

    # ---- per-generation tile sizing under an explicit VMEM budget ----------
    cap = _vmem_capacity_bytes()
    budget = int(cap * 0.70)

    tm = _pick_tile(b, block_m, 8)       # row tile: multiple of 8, divides B
    tn = _pick_tile(n, block_n, 128)     # col tile: multiple of 128, or == N

    def _acc_w(tn_):
        return 128 if tn_ % 128 == 0 else tn_

    def _resident_bytes(tm_, tn_):
        return (2 * tm_ * d * itemsize        # double-buffered row tile
                + 2 * d * tn_ * itemsize      # double-buffered column tile
                + 2 * tm_ * _acc_w(tn_) * 4   # double-buffered output/acc
                + 2 * tm_ * tn_ * 4)          # f32 (tm, tn) temporaries (s, e)

    for _ in range(64):
        if _resident_bytes(tm, tn) <= budget:
            break
        if tn >= tm and tn > 128:
            new_tn = _shrink_tile(n, tn, 128)
            if new_tn < tn:
                tn = new_tn
                continue
        new_tm = _shrink_tile(b, tm, 8)
        if new_tm < tm:
            tm = new_tm
            continue
        new_tn = _shrink_tile(n, tn, 128)
        if new_tn < tn:
            tn = new_tn
            continue
        break

    acc_w = _acc_w(tn)
    nb_rows, nb_cols = n // tm, n // tn      # tm <= b  =>  nb_rows >= 2
    vmem_limit = int(max(32 << 20,
                         min(0.90 * cap, _resident_bytes(tm, tn) + (24 << 20))))

    # bf16 exp only where the EUP supports it (v6e / v7x) and the regime is
    # EUP-bound (small D); error (~0.4%/term) is inside the bf16 path tolerance.
    if exp_in_bf16 is None:
        kind = _device_kind()
        exp_in_bf16 = (jnp.dtype(matmul_dtype) == jnp.dtype(jnp.bfloat16)
                       and d <= 256
                       and any(t in kind for t in ("v6", "v7", "7x")))
    exp_dtype = jnp.bfloat16 if exp_in_bf16 else jnp.float32

    cost = pl.CostEstimate(
        flops=2 * n * n * d + 3 * n * n,
        transcendentals=n * n,
        bytes_accessed=(n * d + nb_rows * n * d) * itemsize + n * acc_w * 4,
    )

    kernel = functools.partial(_simclr_rowsum_kernel, inv_temp=inv_temp,
                               acc_w=acc_w, exp_dtype=exp_dtype)

    row_exp_sums = pl.pallas_call(
        kernel,
        out_shape=jax.ShapeDtypeStruct((n, acc_w), jnp.float32),
        grid_spec=pltpu.PrefetchScalarGridSpec(
            num_scalar_prefetch=0,
            grid=(nb_rows, nb_cols),
            in_specs=[
                # row tile: resident across the whole column sweep
                pl.BlockSpec((tm, d), lambda i, k: (i, 0)),
                # column tile, pre-transposed -> no in-kernel XLU transpose
                pl.BlockSpec((d, tn), lambda i, k: (0, k)),
            ],
            # lane-dense output doubles as the streaming accumulator
            out_specs=pl.BlockSpec((tm, acc_w), lambda i, k: (i, 0)),
        ),
        compiler_params=pltpu.CompilerParams(
            dimension_semantics=("parallel", "arbitrary"),
            vmem_limit_bytes=vmem_limit),
        cost_estimate=cost,
    )(zs, zsT)                                                   # (N, ACC) f32

    # O(N) epilogue in the wrapper (XLA-fused): lane reduce, remove the
    # diagonal's exp(0) = 1 analytically, log, subtract positives, mean.
    # Note: for extremely small T the `- 1.0` can lose precision (all
    # off-diagonal exp terms underflow); fine for practical SimCLR temperatures.
    row_sum = jnp.sum(row_exp_sums, axis=-1)                     # (N,)
    lse = inv_temp + jnp.log(row_sum - 1.0)
    return jnp.sum(lse - pos) / jnp.float32(n)


def _simclr_loss_ref(z_i, z_j, temperature):
    """Pure-JAX reference replicating the PyTorch module exactly."""
    b, _ = z_i.shape
    n = 2 * b
    z = jnp.concatenate([z_i, z_j], axis=0)
    zn = z / jnp.maximum(jnp.linalg.norm(z, axis=-1, keepdims=True), 1e-8)
    sim = (zn @ zn.T) / temperature
    pos = jnp.concatenate(
        [jnp.diagonal(sim, offset=b), jnp.diagonal(sim, offset=-b)], axis=0
    )  # (N,)
    mask = jnp.ones((n, n), dtype=bool)
    mask = mask.at[jnp.arange(n), jnp.arange(n)].set(False)
    mask = mask.at[jnp.arange(b), b + jnp.arange(b)].set(False)
    mask = mask.at[b + jnp.arange(b), jnp.arange(b)].set(False)
    neg = sim[mask].reshape(n, n - 2)
    logits = jnp.concatenate([pos[:, None], neg], axis=1)        # (N, N-1)
    lse = jax.scipy.special.logsumexp(logits, axis=-1)
    loss = jnp.sum(lse - logits[:, 0]) / n
    return loss


if __name__ == "__main__":
    key = jax.random.PRNGKey(0)
    k1, k2 = jax.random.split(key)
    batch_size, feat_dim, temperature = 8, 128, 0.5
    z_i = jax.random.normal(k1, (batch_size, feat_dim), dtype=jnp.float32)
    z_j = jax.random.normal(k2, (batch_size, feat_dim), dtype=jnp.float32)

    ref = jax.block_until_ready(_simclr_loss_ref(z_i, z_j, temperature))

    # Exact-semantics path (f32 MXU operands, f32 exp) -> tight tolerance.
    loss_f32 = jax.block_until_ready(
        simclr_loss(z_i, z_j, temperature, matmul_dtype=jnp.float32))
    assert jnp.allclose(loss_f32, ref, rtol=1e-5, atol=1e-5), (loss_f32, ref)

    # Fast path (default): bf16 MXU operands, f32 accumulation,
    # bf16 exp where the EUP supports it.
    loss_bf16 = jax.block_until_ready(simclr_loss(z_i, z_j, temperature))
    assert jnp.allclose(loss_bf16, ref, rtol=1e-2, atol=1e-2), (loss_bf16, ref)

    print("KERNEL_OK")
</pallas_src>

<mosaic_0001>
module attributes {stable_mosaic.version = 11 : i64} {
  func.func @_simclr_rowsum_kernel(%arg0: i32, %arg1: i32, %arg2: memref<8x128xf32, #tpu.memory_space<vmem>>, %arg3: memref<128x16xf32, #tpu.memory_space<vmem>>, %arg4: memref<8x16xf32, #tpu.memory_space<vmem>>) attributes {dimension_semantics = [#tpu.dimension_semantics<parallel>, #tpu.dimension_semantics<arbitrary>], iteration_bounds = array<i64: 2, 1>, scalar_prefetch = 0 : i64, scratch_operands = 0 : i64, tpu.core_type = #tpu.core_type<tc>, window_params = [{transform_indices = @transform_0, window_bounds = array<i64: 8, 128>}, {transform_indices = @transform_1, window_bounds = array<i64: 128, 16>}, {transform_indices = @transform_2, window_bounds = array<i64: 8, 16>}]} {
    %c0_i32 = arith.constant 0 : i32
    %0 = arith.cmpi eq, %arg1, %c0_i32 : i32
    %1 = arith.extui %0 : i1 to i32
    %c0_i32_0 = arith.constant 0 : i32
    %2 = arith.cmpi ne, %1, %c0_i32_0 : i32
    scf.if %2 {
      %cst_9 = arith.constant 0.000000e+00 : f32
      %12 = vector.broadcast %cst_9 : f32 to vector<8x16xf32>
      %c0_10 = arith.constant 0 : index
      %c0_11 = arith.constant 0 : index
      %13 = vector.load %arg4[%c0_10, %c0_11] : memref<8x16xf32, #tpu.memory_space<vmem>>, vector<8x16xf32>
      tpu.vector_store %arg4[%c0_10, %c0_11], %12 {strides = array<i32>} : memref<8x16xf32, #tpu.memory_space<vmem>>, vector<8x16xf32>,
    } else {
    }
    %c0 = arith.constant 0 : index
    %c0_1 = arith.constant 0 : index
    %3 = vector.load %arg2[%c0, %c0_1] : memref<8x128xf32, #tpu.memory_space<vmem>>, vector<8x128xf32>
    %c0_2 = arith.constant 0 : index
    %c0_3 = arith.constant 0 : index
    %4 = vector.load %arg3[%c0_2, %c0_3] : memref<128x16xf32, #tpu.memory_space<vmem>>, vector<128x16xf32>
    %cst = arith.constant dense<0.000000e+00> : vector<8x16xf32>
    %5 = tpu.matmul %3, %4, %cst {dimension_numbers = #tpu.dot_dimension_numbers<[1], [0], [0], [1], [0, 0, 1, 1], [], []>} : vector<8x128xf32>, vector<128x16xf32>, vector<8x16xf32> -> vector<8x16xf32>
    %cst_4 = arith.constant 2.000000e+00 : f32
    %6 = vector.broadcast %cst_4 : f32 to vector<8x16xf32>
    %7 = arith.subf %5, %6 : vector<8x16xf32>
    %8 = math.exp %7 : vector<8x16xf32>
    %c0_5 = arith.constant 0 : index
    %c0_6 = arith.constant 0 : index
    %9 = vector.load %arg4[%c0_5, %c0_6] : memref<8x16xf32, #tpu.memory_space<vmem>>, vector<8x16xf32>
    %10 = arith.addf %9, %8 : vector<8x16xf32>
    %c0_7 = arith.constant 0 : index
    %c0_8 = arith.constant 0 : index
    %11 = vector.load %arg4[%c0_7, %c0_8] : memref<8x16xf32, #tpu.memory_space<vmem>>, vector<8x16xf32>
    tpu.vector_store %arg4[%c0_7, %c0_8], %10 {strides = array<i32>} : memref<8x16xf32, #tpu.memory_space<vmem>>, vector<8x16xf32>,
    return
  }
  func.func @transform_0(%arg0: i32, %arg1: i32) -> (i32, i32) {
    %c0_i32 = arith.constant 0 : i32
    %c0_i32_0 = arith.constant 0 : i32
    return %arg0, %c0_i32 : i32, i32
  }
  func.func @transform_1(%arg0: i32, %arg1: i32) -> (i32, i32) {
    %c0_i32 = arith.constant 0 : i32
    %c0_i32_0 = arith.constant 0 : i32
    return %c0_i32, %arg1 : i32, i32
  }
  func.func @transform_2(%arg0: i32, %arg1: i32) -> (i32, i32) {
    %c0_i32 = arith.constant 0 : i32
    %c0_i32_0 = arith.constant 0 : i32
    return %arg0, %c0_i32 : i32, i32
  }
}

</mosaic_0001>

<llo_original>
// kernel: tpu_custom_call.1
$region0: #{tpu_custom_call.1}
  #allocation0 [shape = 'u32[]', space=smem, size = 0x4, offset = 0x4, fixed_abs, tag = 'smem constant byte address 0x4 - core index']
  #allocation1 [shape = 'u32[144,128]{1,0:T(1,128)}', space=vmem, size = 0x12000, scoped, tag = 'internal scratch']
  %s0 = inlined_call_operand.vmem [shape: f32[16,128], index: 0, kind: input, shape index: {}]
  %s1 = inlined_call_operand.vmem [shape: f32[128,16], index: 1, kind: input, shape index: {}]
  %s2 = inlined_call_operand.hbm [shape: f32[16,16], index: 2, kind: output, shape index: {}]
  %s3 = sld [smem:[#allocation0]]
  $region45: #{tpu_custom_call.1} parent=0
    _
  %s5 = ssub.s32 1, %s3
  %s6 = scalar_select 0, %s5, %s3
  $region1: #{tpu_custom_call.1} parent=0
    #allocation2 [shape = 'u8[8192]{0}', space=vmem, size = 0x2000, scoped, tag = 'output window, operand 0']
    #allocation3 [shape = 's32[2]{0}', space=sflag, size = 0x8, scoped, tag = 'scoped memory for tpu_custom_call.1']
    %7 = vsyncpa [#allocation3], 0
    %s8 = scalar_lea.sflag [#allocation3], 1
    %9 = vsyncpa %s8, 0
    loop: start=0, step=1, limit=4
    $region2: #{tpu_custom_call.1} parent=1 // loop_pre_header
      _
    $region3: #{tpu_custom_call.1} parent=1 // loop_header
      %s11 = sphi 0, %s15
      %p12 = scmp.ge.s32.totalorder %s11, 4
      %s18 = sphi 0, %s30
      %s19 = sphi 0, %s26
      %s20 = sphi 0, %s18
      %s21 = sphi 0, %s19
      %s22 = sphi 0, %s20
      %s23 = sphi 0, %s21
      %s33 = sphi 0, %s35
      %s36 = sphi 0, %s33
      %s37 = sphi 0, %s36
      %s53 = sphi 0, %s37
      %s59 = sphi 0, %s61
      %s62 = sphi 0, %s59
      %s63 = sphi 0, %s62
      %s79 = sphi 0, %s63
      %s85 = sphi 0, %s87
      %s88 = sphi 0, %s85
      %s89 = sphi 0, %s88
      %s105 = sphi 0, %s89
    $region4: #{tpu_custom_call.1} parent=1 // loop_header_branch
      %14 = sbr.rel (%p12) target = $region8
    $region5: #{tpu_custom_call.1} parent=1 // loop_body
      %s16 = ssub.s32 %s11, 1
      %s17 = ssub.s32 %s11, 2
      %s24 = sadd.s32 1, %s19
      %p25 = scmp.ge.s32.totalorder %s24, 1
      %s26 = scalar_select %p25, 0, %s24
      %s27 = sadd.s32 1, %s18
      %s28 = scalar_select %p25, %s27, %s18
      %p29 = scmp.ge.s32.totalorder %s28, 2
      %s30 = scalar_select %p29, 0, %s28
      %s31 = ssub.s32 %s18, %s30
      %p32 = scmp.eq.s32.totalorder %s31, 0
      %s34 = sadd.s32 %s33, 1
      %s35 = scalar_select %p32, %s33, %s34
      %p38 = pneg %p32
      %p39 = scmp.eq.s32.totalorder %s11, 1
      %p40 = por %p38, %p39
      %p41 = scmp.ne.s32.totalorder %s33, %s36
      %p42 = scmp.eq.s32.totalorder %s11, 0
      %p43 = por %p41, %p42
      %p44 = scmp.ne.s32.totalorder %s33, %s36
      %p45 = scmp.eq.s32.totalorder %s16, 1
      %p46 = por %p44, %p45
      %p47 = scmp.ne.s32.totalorder %s36, %s37
      %p48 = scmp.eq.s32.totalorder %s16, 0
      %p49 = por %p47, %p48
      %p50 = scmp.ne.s32.totalorder %s36, %s37
      %p51 = scmp.eq.s32.totalorder %s17, 1
      %p52 = por %p50, %p51
      %p54 = scmp.ne.s32.totalorder %s37, %s53
      %p55 = scmp.eq.s32.totalorder %s17, 0
      %p56 = por %p54, %p55
      %s57 = ssub.s32 %s19, %s26
      %p58 = scmp.eq.s32.totalorder %s57, 0
      %s60 = sadd.s32 %s59, 1
      %s61 = scalar_select %p58, %s59, %s60
      %p64 = pneg %p58
      %p65 = scmp.eq.s32.totalorder %s11, 1
      %p66 = por %p64, %p65
      %p67 = scmp.ne.s32.totalorder %s59, %s62
      %p68 = scmp.eq.s32.totalorder %s11, 0
      %p69 = por %p67, %p68
      %p70 = scmp.ne.s32.totalorder %s59, %s62
      %p71 = scmp.eq.s32.totalorder %s16, 1
      %p72 = por %p70, %p71
      %p73 = scmp.ne.s32.totalorder %s62, %s63
      %p74 = scmp.eq.s32.totalorder %s16, 0
      %p75 = por %p73, %p74
      %p76 = scmp.ne.s32.totalorder %s62, %s63
      %p77 = scmp.eq.s32.totalorder %s17, 1
      %p78 = por %p76, %p77
      %p80 = scmp.ne.s32.totalorder %s63, %s79
      %p81 = scmp.eq.s32.totalorder %s17, 0
      %p82 = por %p80, %p81
      %s83 = ssub.s32 %s18, %s30
      %p84 = scmp.eq.s32.totalorder %s83, 0
      %s86 = sadd.s32 %s85, 1
      %s87 = scalar_select %p84, %s85, %s86
      %p90 = pneg %p84
      %p91 = scmp.eq.s32.totalorder %s11, 1
      %p92 = por %p90, %p91
      %p93 = scmp.ne.s32.totalorder %s85, %s88
      %p94 = scmp.eq.s32.totalorder %s11, 0
      %p95 = por %p93, %p94
      %p96 = scmp.ne.s32.totalorder %s85, %s88
      %p97 = scmp.eq.s32.totalorder %s16, 1
      %p98 = por %p96, %p97
      %p99 = scmp.ne.s32.totalorder %s88, %s89
      %p100 = scmp.eq.s32.totalorder %s16, 0
      %p101 = por %p99, %p100
      %p102 = scmp.ne.s32.totalorder %s88, %s89
      %p103 = scmp.eq.s32.totalorder %s17, 1
      %p104 = por %p102, %p103
      %p106 = scmp.ne.s32.totalorder %s89, %s105
      %p107 = scmp.eq.s32.totalorder %s17, 0
      %p108 = por %p106, %p107
      %p109 = scmp.le.s32.totalorder 1, %s11
      %p110 = scmp.lt.s32.totalorder %s11, 3
      %p111 = pnand %p109, %p110
      %p112 = pneg %p111
      // Predicated region
      $region9: #{tpu_custom_call.1} parent=5 // pred_check
        _
      $region10: #{tpu_custom_call.1} parent=5 // pred_check_branch
        %114 = sbr.rel (%p111) target = $region12
      $region11: #{tpu_custom_call.1} parent=5 // pred_region
        %s115 = ssub.s32 %s11, 1
        // Predicated region
        $region13: #{tpu_custom_call.1} parent=11 // pred_check
          %p116 = pneg %p75
        $region14: #{tpu_custom_call.1} parent=11 // pred_check_branch
          %118 = sbr.rel (%p116) target = $region16
        $region15: #{tpu_custom_call.1} parent=11 // pred_region
          %p119 = scmp.lt.s32.totalorder %s21, 0
          %s120 = scalar_select %p119, %s21, 0
          %s121 = smul.addr %s120, 8
          %s122 = scalar_lea.vmem %s1, %s121
        $region16: #{tpu_custom_call.1} parent=11 // pred_fallthru
          _
      $region12: #{tpu_custom_call.1} parent=5 // pred_fallthru
        _
      %p123 = scmp.lt.s32.totalorder %s11, 2
      // Predicated region
      $region17: #{tpu_custom_call.1} parent=5 // pred_check
        %p124 = pneg %p123
      $region18: #{tpu_custom_call.1} parent=5 // pred_check_branch
        %126 = sbr.rel (%p124) target = $region20
      $region19: #{tpu_custom_call.1} parent=5 // pred_region
        // Predicated region
        $region21: #{tpu_custom_call.1} parent=19 // pred_check
          %p127 = pneg %p43
        $region22: #{tpu_custom_call.1} parent=19 // pred_check_branch
          %129 = sbr.rel (%p127) target = $region24
        $region23: #{tpu_custom_call.1} parent=19 // pred_region
          %p130 = scmp.lt.s32.totalorder %s18, 1
          %s131 = scalar_select %p130, %s18, 1
          %s132 = smul.addr %s131, 8
          %s133 = scalar_lea.vmem %s0, %s132
        $region24: #{tpu_custom_call.1} parent=19 // pred_fallthru
          _
      $region20: #{tpu_custom_call.1} parent=5 // pred_fallthru
        _
      %p134 = scmp.le.s32.totalorder 1, %s11
      %p135 = scmp.lt.s32.totalorder %s11, 3
      %p136 = pnand %p134, %p135
      %p137 = pneg %p136
      // Predicated region
      $region25: #{tpu_custom_call.1} parent=5 // pred_check
        _
      $region26: #{tpu_custom_call.1} parent=5 // pred_check_branch
        %139 = sbr.rel (%p136) target = $region28
      $region27: #{tpu_custom_call.1} parent=5 // pred_region
        %s140 = ssub.s32 %s11, 1
        %p141 = scmp.lt.s32.totalorder %s20, 1
        %s142 = scalar_select %p141, %s20, 1
        %s143 = smul.addr %s142, 8
        %s144 = scalar_lea.vmem %s0, %s143
        %p145 = pneg %p49
        %p146 = pneg %p46
        %p147 = scmp.lt.s32.totalorder %s21, 0
        %s148 = scalar_select %p147, %s21, 0
        %s149 = smul.addr %s148, 8
        %s150 = scalar_lea.vmem %s1, %s149
        %p151 = pneg %p75
        %p152 = pneg %p72
        %p153 = pneg %p101
        %p154 = pneg %p98
        %s155 = sand.u32 %s88, 1
        %s156 = scalar_lea.sflag [#allocation3], %s155
        %s157 = sand.u32 %s88, 1
        %s158 = smul.addr %s157, 8
        %s159 = scalar_lea.vmem [#allocation2], %s158
        %p160 = scmp.lt.s32.totalorder %s20, 1
        %s161 = scalar_select %p160, %s20, 1
        %s162 = smul.addr %s161, 8
        %s163 = scalar_lea.vmem %s0, %s162
        %p164 = scmp.lt.s32.totalorder %s21, 0
        %s165 = scalar_select %p164, %s21, 0
        %s166 = smul.addr %s165, 8
        %s167 = scalar_lea.vmem %s1, %s166
        %p168 = scmp.eq.s32.totalorder %s21, 0
        // Predicated region
        $region29: #{tpu_custom_call.1} parent=27 // pred_check
          %p169 = pneg %p168
        $region30: #{tpu_custom_call.1} parent=27 // pred_check_branch
          %171 = sbr.rel (%p169) target = $region32
        $region31: #{tpu_custom_call.1} parent=27 // pred_region
          %vm172 = vcmask 130048
          %173 = vst.msk [vmem:[%s159] sm:$0xff] %vm172, 0.0
        $region32: #{tpu_custom_call.1} parent=27 // pred_fallthru
          _
        %v174 = vld [vmem:[%s163] sm:$0xff]
        %v175 = vld [vmem:[%s167] sm:$0xff]
        %v176 = vld [vmem:[%s167 + $0x8] sm:$0xff]
        %v177 = vld [vmem:[%s167 + $0x10] sm:$0xff]
        %v178 = vld [vmem:[%s167 + $0x18] sm:$0xff]
        %v179 = vld [vmem:[%s167 + $0x20] sm:$0xff]
        %v180 = vld [vmem:[%s167 + $0x28] sm:$0xff]
        %v181 = vld [vmem:[%s167 + $0x30] sm:$0xff]
        %v182 = vld [vmem:[%s167 + $0x38] sm:$0xff]
        %v183 = vld [vmem:[%s167 + $0x40] sm:$0xff]
        %v184 = vld [vmem:[%s167 + $0x48] sm:$0xff]
        %v185 = vld [vmem:[%s167 + $0x50] sm:$0xff]
        %v186 = vld [vmem:[%s167 + $0x58] sm:$0xff]
        %v187 = vld [vmem:[%s167 + $0x60] sm:$0xff]
        %v188 = vld [vmem:[%s167 + $0x68] sm:$0xff]
        %v189 = vld [vmem:[%s167 + $0x70] sm:$0xff]
        %v190 = vld [vmem:[%s167 + $0x78] sm:$0xff]
        %191 = vmatprep.subr.mxu0 0.0
        %192 = vmatpush1.msra.mxu0 %v175
        %193 = vmatprep.subr.mxu0 0.0
        %194 = vmatpush1.msra.mxu0 %v176
        %195 = vmatprep.subr.mxu0 0.0
        %196 = vmatpush1.msra.mxu0 %v177
        %197 = vmatprep.subr.mxu0 0.0
        %198 = vmatpush1.msra.mxu0 %v178
        %199 = vmatprep.subr.mxu0 0.0
        %200 = vmatpush1.msra.mxu0 %v179
        %201 = vmatprep.subr.mxu0 0.0
        %202 = vmatpush1.msra.mxu0 %v180
        %203 = vmatprep.subr.mxu0 0.0
        %204 = vmatpush1.msra.mxu0 %v181
        %205 = vmatprep.subr.mxu0 0.0
        %206 = vmatpush1.msra.mxu0 %v182
        %207 = vmatprep.subr.mxu0 0.0
        %208 = vmatpush1.msra.mxu0 %v183
        %209 = vmatprep.subr.mxu0 0.0
        %210 = vmatpush1.msra.mxu0 %v184
        %211 = vmatprep.subr.mxu0 0.0
        %212 = vmatpush1.msra.mxu0 %v185
        %213 = vmatprep.subr.mxu0 0.0
        %214 = vmatpush1.msra.mxu0 %v186
        %215 = vmatprep.subr.mxu0 0.0
        %216 = vmatpush1.msra.mxu0 %v187
        %217 = vmatprep.subr.mxu0 0.0
        %218 = vmatpush1.msra.mxu0 %v188
        %219 = vmatprep.subr.mxu0 0.0
        %220 = vmatpush1.msra.mxu0 %v189
        %221 = vmatprep.subr.mxu0 0.0
        %222 = vmatpush1.msra.mxu0 %v190
        %223 = vmatprep.subr.mxu0 0.0
        %224 = vmatpush1.msra.mxu0 0.0
        %225 = vmatprep.subr.mxu0 0.0
        %226 = vmatpush1.msra.mxu0 0.0
        %227 = vmatprep.subr.mxu0 0.0
        %228 = vmatpush1.msra.mxu0 0.0
        %229 = vmatprep.subr.mxu0 0.0
        %230 = vmatpush1.msra.mxu0 0.0
        %231 = vmatprep.subr.mxu0 0.0
        %232 = vmatpush1.msra.mxu0 0.0
        %233 = vmatprep.subr.mxu0 0.0
        %234 = vmatpush1.msra.mxu0 0.0
        %235 = vmatprep.subr.mxu0 0.0
        %236 = vmatpush1.msra.mxu0 0.0
        %237 = vmatprep.subr.mxu0 0.0
        %238 = vmatpush1.msra.mxu0 0.0
        %239 = vmatprep.subr.mxu0 0.0
        %240 = vmatpush1.msra.mxu0 0.0
        %241 = vmatprep.subr.mxu0 0.0
        %242 = vmatpush1.msra.mxu0 0.0
        %243 = vmatprep.subr.mxu0 0.0
        %244 = vmatpush1.msra.mxu0 0.0
        %245 = vmatprep.subr.mxu0 0.0
        %246 = vmatpush1.msra.mxu0 0.0
        %247 = vmatprep.subr.mxu0 0.0
        %248 = vmatpush1.msra.mxu0 0.0
        %249 = vmatprep.subr.mxu0 0.0
        %250 = vmatpush1.msra.mxu0 0.0
        %251 = vmatprep.subr.mxu0 0.0
        %252 = vmatpush1.msra.mxu0 0.0
        %253 = vmatprep.subr.mxu0 0.0
        %254 = vmatpush1.msra.mxu0 0.0
        %255 = vmatprep.mubr.f32.mxu0 0.0
        %256 = vmatmul.mubr.f32.gmra.mrb[0].mxu0 %v174
        %v257 = vpop.f32.mrb[0].mxu0
        %v258 = vadd.f32 0.0, %v257
        %v259 = vpop.f32.mrb[0].mxu0
        %260 = vdwg.mxu0
        %v261 = vsub.f32 %v258, 2.0
        %v262 = vmul.f32 %v261, 1.442695
        %v263 = vpow.pop %v262
        %v264 = vld [vmem:[%s159] sm:$0xff]
        %v265 = vadd.f32 %v264, %v263
        %vm266 = vcmask 130048
        %267 = vst.msk [vmem:[%s159] sm:$0xff] %vm266, %v265
        %s268 = sand.u32 %s88, 1
        %s269 = scalar_lea.sflag [#allocation3], %s268
        %s270 = sand.u32 %s88, 1
        %s271 = smul.addr %s270, 8
        %s272 = scalar_lea.vmem [#allocation2], %s271
        // Predicated region
        $region33: #{tpu_custom_call.1} parent=27 // pred_check
          %p273 = pneg %p98
        $region34: #{tpu_custom_call.1} parent=27 // pred_check_branch
          %275 = sbr.rel (%p273) target = $region36
        $region35: #{tpu_custom_call.1} parent=27 // pred_region
          %s277 = ssub.s32 128, 128
          %278 = vsyncadd %s269, %s277
          %s279 = smul.addr %s20, 128
          %s280 = scalar_lea.hbm %s2, %s279
          %s282 = sshll.u32 %s272, 4
          %s283 = int_to_ptr.vmem [resolvable:$true] %s282
          %285 = dma.vmem_to_hbm [thread:$0]  %s283, 128, %s280, %s269
        $region36: #{tpu_custom_call.1} parent=27 // pred_fallthru
          _
      $region28: #{tpu_custom_call.1} parent=5 // pred_fallthru
        _
      %p286 = scmp.le.s32.totalorder 2, %s11
      // Predicated region
      $region37: #{tpu_custom_call.1} parent=5 // pred_check
        %p287 = pneg %p286
      $region38: #{tpu_custom_call.1} parent=5 // pred_check_branch
        %289 = sbr.rel (%p287) target = $region40
      $region39: #{tpu_custom_call.1} parent=5 // pred_region
        %s290 = ssub.s32 %s11, 2
        // Predicated region
        $region41: #{tpu_custom_call.1} parent=39 // pred_check
          %p291 = pneg %p104
        $region42: #{tpu_custom_call.1} parent=39 // pred_check_branch
          %293 = sbr.rel (%p291) target = $region44
        $region43: #{tpu_custom_call.1} parent=39 // pred_region
          %s294 = sand.u32 %s89, 1
          %s295 = scalar_lea.sflag [#allocation3], %s294
          %s296 = sand.u32 %s89, 1
          %s297 = smul.addr %s296, 8
          %s298 = scalar_lea.vmem [#allocation2], %s297
          %299 = dma.done %s295, 128
        $region44: #{tpu_custom_call.1} parent=39 // pred_fallthru
          _
      $region40: #{tpu_custom_call.1} parent=5 // pred_fallthru
        _
    $region6: #{tpu_custom_call.1} parent=1 // loop_footer
      %s15 = sadd.s32 1, %s11
    $region7: #{tpu_custom_call.1} parent=1 // loop_footer_branch
      %10 = sbr.rel target = $region3
    $region8: #{tpu_custom_call.1} parent=1 // loop_exit
      _
    %300 = vsyncpa [#allocation3], 1
    %s301 = scalar_lea.sflag [#allocation3], 1
    %302 = vsyncpa %s301, 1

</llo_original>
